<compile_context>
chip_gen: v5e
topology: v5e:2x2
jax: 0.10.0
libtpu: 0.0.40
codegen_flags: <defaults>
</compile_context>

<pallas_src>
import jax
import jax.numpy as jnp
from jax.experimental import pallas as pl
from jax.experimental.pallas import tpu as pltpu


def sinusoidal_position_encoding(max_seq_length: int, hidden_size: int) -> jnp.ndarray:
    """pe[p, 2i] = sin(p/10000^(2i/d)), pe[p, 2i+1] = cos(p/10000^(2i/d))."""
    pos = jnp.arange(max_seq_length, dtype=jnp.float32)[:, None]        # [L, 1]
    i = jnp.arange(0, hidden_size, 2, dtype=jnp.float32)[None, :]       # [1, ceil(H/2)]
    div = jnp.exp(-(jnp.log(10000.0) / hidden_size) * i)                # [1, ceil(H/2)]
    angles = pos * div                                                   # [L, ceil(H/2)]
    pe = jnp.zeros((max_seq_length, hidden_size), dtype=jnp.float32)
    pe = pe.at[:, 0::2].set(jnp.sin(angles))
    pe = pe.at[:, 1::2].set(jnp.cos(angles)[:, : hidden_size // 2])      # odd H safe
    return pe


def _pe_add_kernel(emb_ref, pe_ref, out_ref):
    # emb_ref/out_ref: (Bblk, TS, H); pe_ref: (TS, H) -> broadcasts over batch dim.
    # PE is already in the embedding dtype (module-level cached cast).
    out_ref[...] = emb_ref[...] + pe_ref[...]


def _round_up(x: int, m: int) -> int:
    return ((x + m - 1) // m) * m


# ~5 MiB per embedding/output block: big enough to amortize the ~0.35 us
# per-grid-step overhead on v7x's 3.2 TB/s HBM, small enough that the
# double-buffered footprint (<= 2 * 3 * 5 MiB = 30 MiB) clears every chip's
# raiseable scoped-VMEM limit (v7x: 64 MiB physical).
_BLOCK_BUDGET_BYTES = 5 * 1024 * 1024
_MAX_SEQ_TILE_ROWS = 2048
_VMEM_LIMIT_BYTES = 48 * 1024 * 1024


def _sublane_multiple(dtype) -> int:
    # Packed-sublane multiple: 8 rows for f32, 16 for bf16, 32 for int8/fp8.
    return max(8, 32 // jnp.dtype(dtype).itemsize)


def _choose_tiling(B, S, H, dtype, seq_tile=None, force_per_batch=False):
    """Returns (fold_batch, seq_tile_rows). seq_tile_rows is always a multiple of 8."""
    sub = _sublane_multiple(dtype)
    row_bytes = H * jnp.dtype(dtype).itemsize
    fold = (not force_per_batch) and (B * sub * row_bytes <= _BLOCK_BUDGET_BYTES)
    rows_per_block = B if fold else 1
    if seq_tile is not None:
        ts = _round_up(int(seq_tile), 8)
    else:
        cap = (_BLOCK_BUDGET_BYTES // (rows_per_block * row_bytes)) // sub * sub
        cap = max(sub, min(cap, _MAX_SEQ_TILE_ROWS))
        ts = min(_round_up(S, sub), cap)
    return fold, ts


def positional_encoding_forward(embeddings: jnp.ndarray,
                                pe_table: jnp.ndarray,
                                *,
                                seq_tile=None,
                                force_per_batch=False) -> jnp.ndarray:
    """embeddings: [B, S, H]; pe_table: FULL [max_seq_length, H] in embeddings.dtype."""
    B, S, H = embeddings.shape
    L, Hp = pe_table.shape
    assert Hp == H and S <= L
    dtype = embeddings.dtype
    if pe_table.dtype != dtype:  # fallback; the module caches the cast so this is a no-op
        pe_table = pe_table.astype(dtype)

    fold, ts = _choose_tiling(B, S, H, dtype, seq_tile, force_per_batch)
    num_seq_tiles = pl.cdiv(S, ts)

    if fold:
        # Whole batch in one block; PE fetched once per seq tile, broadcast over B.
        grid = (num_seq_tiles,)
        in_specs = [
            pl.BlockSpec((B, ts, H), lambda s: (0, s, 0)),
            pl.BlockSpec((ts, H), lambda s: (s, 0)),
        ]
        out_specs = pl.BlockSpec((B, ts, H), lambda s: (0, s, 0))
        dim_sem = ("parallel",)
    else:
        # Large B*H: per-batch blocks, batch innermost so the PE block index is
        # unchanged across the inner axis (its DMA is skipped).
        grid = (num_seq_tiles, B)
        in_specs = [
            pl.BlockSpec((1, ts, H), lambda s, b: (b, s, 0)),
            pl.BlockSpec((ts, H), lambda s, b: (s, 0)),
        ]
        out_specs = pl.BlockSpec((1, ts, H), lambda s, b: (b, s, 0))
        dim_sem = ("parallel", "parallel")

    return pl.pallas_call(
        _pe_add_kernel,
        out_shape=jax.ShapeDtypeStruct((B, S, H), dtype),
        grid_spec=pltpu.PrefetchScalarGridSpec(
            num_scalar_prefetch=0,
            grid=grid,
            in_specs=in_specs,
            out_specs=out_specs,
        ),
        compiler_params=pltpu.CompilerParams(
            dimension_semantics=dim_sem,
            vmem_limit_bytes=_VMEM_LIMIT_BYTES,
        ),
    )(embeddings, pe_table)


class PositionalEncodingPallas:
    """Mirror of the PyTorch module (method='absolute' only)."""

    def __init__(self, method="absolute", hidden_size=768, max_seq_length=4096):
        assert method in ["absolute", "rotary", "learnable"]
        if method in ("rotary", "learnable"):
            raise NotImplementedError()  # TODO(synk): rotary/learnable not implemented (matches PyTorch spec)
        self.method = method
        self.hidden_size = hidden_size
        self.max_seq_length = max_seq_length
        self.fix_weight = True
        # Deterministic parameter construction (no checkpoint load).
        self.fixed_positional_encoding = sinusoidal_position_encoding(
            max_seq_length, hidden_size
        )
        # Per-activation-dtype cache of the cast PE table (avoids a per-call
        # full-table cast pass in HBM).
        self._pe_cache = {jnp.dtype(jnp.float32): self.fixed_positional_encoding}

    @property
    def fix_weight(self):
        return self._fix_weight

    @fix_weight.setter
    def fix_weight(self, fix_weight):
        assert isinstance(fix_weight, bool)
        self._fix_weight = fix_weight

    def _pe_for_dtype(self, dtype):
        dt = jnp.dtype(dtype)
        pe = self._pe_cache.get(dt)
        if pe is None:
            pe = self.fixed_positional_encoding.astype(dt)
            self._pe_cache[dt] = pe
        return pe

    def __call__(self, embeddings, *, seq_tile=None, force_per_batch=False):
        return positional_encoding_forward(
            embeddings,
            self._pe_for_dtype(embeddings.dtype),
            seq_tile=seq_tile,
            force_per_batch=force_per_batch,
        )


if __name__ == "__main__":
    key = jax.random.PRNGKey(0)

    # 1) Toy shapes: H not a multiple of 128, single seq tile, folded batch.
    B, S, H = 2, 8, 32
    module = PositionalEncodingPallas(method="absolute", hidden_size=H, max_seq_length=64)
    emb = jax.random.normal(key, (B, S, H), dtype=jnp.float32)
    out = jax.block_until_ready(module(emb))
    ref = emb + module.fixed_positional_encoding[:S][None, :, :]
    assert out.shape == (B, S, H)
    assert jnp.allclose(out, ref, atol=1e-6), "mismatch (toy shapes)"

    # 2) Lane-dense production layout: H multiple of 128, exact tiling.
    B2, S2, H2 = 2, 1024, 128
    module2 = PositionalEncodingPallas(method="absolute", hidden_size=H2, max_seq_length=2048)
    emb2 = jax.random.normal(jax.random.PRNGKey(1), (B2, S2, H2), dtype=jnp.float32)
    out2 = jax.block_until_ready(module2(emb2))
    ref2 = emb2 + module2.fixed_positional_encoding[:S2][None, :, :]
    assert jnp.allclose(out2, ref2, atol=1e-6), "mismatch (tiled shapes)"

    # 3) Ragged seq tail + non-128 H + bf16 (partial last block, masked stores).
    B3, S3, H3 = 3, 100, 96
    module3 = PositionalEncodingPallas(method="absolute", hidden_size=H3, max_seq_length=256)
    emb3 = jax.random.normal(jax.random.PRNGKey(2), (B3, S3, H3), dtype=jnp.bfloat16)
    out3 = jax.block_until_ready(module3(emb3, seq_tile=64))
    ref3 = emb3 + module3.fixed_positional_encoding[:S3].astype(jnp.bfloat16)[None, :, :]
    assert out3.shape == (B3, S3, H3)
    assert jnp.allclose(out3.astype(jnp.float32), ref3.astype(jnp.float32),
                        atol=1e-2), "mismatch (ragged bf16)"

    # 4) Force the per-batch (large-B) grid path on small shapes.
    B4, S4, H4 = 2, 64, 128
    module4 = PositionalEncodingPallas(method="absolute", hidden_size=H4, max_seq_length=128)
    emb4 = jax.random.normal(jax.random.PRNGKey(3), (B4, S4, H4), dtype=jnp.float32)
    out4 = jax.block_until_ready(module4(emb4, seq_tile=32, force_per_batch=True))
    ref4 = emb4 + module4.fixed_positional_encoding[:S4][None, :, :]
    assert jnp.allclose(out4, ref4, atol=1e-6), "mismatch (per-batch path)"

    print("KERNEL_OK")
</pallas_src>

<mosaic_0001>
module attributes {stable_mosaic.version = 11 : i64} {
  func.func @_pe_add_kernel(%arg0: i32, %arg1: memref<2x8x32xf32, #tpu.memory_space<vmem>>, %arg2: memref<8x32xf32, #tpu.memory_space<vmem>>, %arg3: memref<2x8x32xf32, #tpu.memory_space<vmem>>) attributes {dimension_semantics = [#tpu.dimension_semantics<parallel>], iteration_bounds = array<i64: 1>, scalar_prefetch = 0 : i64, scratch_operands = 0 : i64, tpu.core_type = #tpu.core_type<tc>, window_params = [{transform_indices = @transform_0, window_bounds = array<i64: 2, 8, 32>}, {transform_indices = @transform_1, window_bounds = array<i64: 8, 32>}, {transform_indices = @transform_2, window_bounds = array<i64: 2, 8, 32>}]} {
    %c0 = arith.constant 0 : index
    %c0_0 = arith.constant 0 : index
    %c0_1 = arith.constant 0 : index
    %0 = vector.load %arg1[%c0, %c0_0, %c0_1] : memref<2x8x32xf32, #tpu.memory_space<vmem>>, vector<2x8x32xf32>
    %c0_2 = arith.constant 0 : index
    %c0_3 = arith.constant 0 : index
    %1 = vector.load %arg2[%c0_2, %c0_3] : memref<8x32xf32, #tpu.memory_space<vmem>>, vector<8x32xf32>
    %2 = vector.shape_cast %1 : vector<8x32xf32> to vector<1x8x32xf32>
    %3 = vector.broadcast %2 : vector<1x8x32xf32> to vector<2x8x32xf32>
    %4 = arith.addf %0, %3 : vector<2x8x32xf32>
    %c0_4 = arith.constant 0 : index
    %c0_5 = arith.constant 0 : index
    %c0_6 = arith.constant 0 : index
    %5 = vector.load %arg3[%c0_4, %c0_5, %c0_6] : memref<2x8x32xf32, #tpu.memory_space<vmem>>, vector<2x8x32xf32>
    tpu.vector_store %arg3[%c0_4, %c0_5, %c0_6], %4 {strides = array<i32>} : memref<2x8x32xf32, #tpu.memory_space<vmem>>, vector<2x8x32xf32>,
    return
  }
  func.func @transform_0(%arg0: i32) -> (i32, i32, i32) {
    %c0_i32 = arith.constant 0 : i32
    %c0_i32_0 = arith.constant 0 : i32
    %c0_i32_1 = arith.constant 0 : i32
    return %c0_i32, %arg0, %c0_i32_0 : i32, i32, i32
  }
  func.func @transform_1(%arg0: i32) -> (i32, i32) {
    %c0_i32 = arith.constant 0 : i32
    %c0_i32_0 = arith.constant 0 : i32
    return %arg0, %c0_i32 : i32, i32
  }
  func.func @transform_2(%arg0: i32) -> (i32, i32, i32) {
    %c0_i32 = arith.constant 0 : i32
    %c0_i32_0 = arith.constant 0 : i32
    %c0_i32_1 = arith.constant 0 : i32
    return %c0_i32, %arg0, %c0_i32_0 : i32, i32, i32
  }
}

</mosaic_0001>

<llo_original>
// kernel: tpu_custom_call.1
$region0: #{tpu_custom_call.1}
  #allocation0 [shape = 'u32[]', space=smem, size = 0x4, offset = 0x4, fixed_abs, tag = 'smem constant byte address 0x4 - core index']
  #allocation1 [shape = 'u32[72,128]{1,0:T(1,128)}', space=vmem, size = 0x9000, scoped, tag = 'internal scratch']
  %s0 = inlined_call_operand.vmem [shape: f32[2,8,32], index: 0, kind: input, shape index: {}]
  %s1 = inlined_call_operand.vmem [shape: f32[64,32], index: 1, kind: input, shape index: {}]
  %s2 = inlined_call_operand.hbm [shape: f32[2,8,32], index: 2, kind: output, shape index: {}]
  %s3 = sld [smem:[#allocation0]]
  $region18: #{tpu_custom_call.1} parent=0
    _
  %s5 = ssub.s32 1, %s3
  %s6 = scalar_select 0, %s5, %s3
  $region1: #{tpu_custom_call.1} parent=0
    #allocation2 [shape = 'u8[8192]{0}', space=vmem, size = 0x2000, scoped, tag = 'output window, operand 0, single buffered']
    #allocation3 [shape = 's32[1]{0}', space=sflag, size = 0x4, scoped, tag = 'scoped memory for tpu_custom_call.1']
    %7 = vsyncpa [#allocation3], 0
    // Predicated region
    $region2: #{tpu_custom_call.1} parent=1 // pred_check
      _
    $region3: #{tpu_custom_call.1} parent=1 // pred_check_branch
      %9 = sbr.rel (0) target = $region5
    $region4: #{tpu_custom_call.1} parent=1 // pred_region
      _
    $region5: #{tpu_custom_call.1} parent=1 // pred_fallthru
      _
    // Predicated region
    $region6: #{tpu_custom_call.1} parent=1 // pred_check
      _
    $region7: #{tpu_custom_call.1} parent=1 // pred_check_branch
      %11 = sbr.rel (0) target = $region9
    $region8: #{tpu_custom_call.1} parent=1 // pred_region
      _
    $region9: #{tpu_custom_call.1} parent=1 // pred_fallthru
      _
    %v12 = vld [vmem:[%s0] sm:$0xff]
    %v13 = vld [vmem:[%s0 + $0x8] sm:$0xff]
    %v14 = vld [vmem:[%s1] sm:$0xff]
    %v15 = vadd.f32 %v12, %v14
    %v16 = vadd.f32 %v13, %v14
    %vm17 = vcmask 261120
    %18 = vst.msk [vmem:[#allocation2] sm:$0xff] %vm17, %v15
    %19 = vst.msk [vmem:[#allocation2 + $0x8] sm:$0xff] %vm17, %v16
    // Predicated region
    $region10: #{tpu_custom_call.1} parent=1 // pred_check
      _
    $region11: #{tpu_custom_call.1} parent=1 // pred_check_branch
      %21 = sbr.rel (0) target = $region13
    $region12: #{tpu_custom_call.1} parent=1 // pred_region
      %23 = vsyncadd [#allocation3], 0
      %s24 = sshll.u32 [#allocation2], 4
      %s25 = int_to_ptr.vmem [resolvable:$true] %s24
      %s26 = sshll.u32 %s2, 4
      %s27 = int_to_ptr.hbm [resolvable:$true] %s26
      %32 = dma.vmem_to_hbm [thread:$0]  %s25, 256, %s27, [#allocation3], 128, 128, 8
    $region13: #{tpu_custom_call.1} parent=1 // pred_fallthru
      _
    // Predicated region
    $region14: #{tpu_custom_call.1} parent=1 // pred_check
      _
    $region15: #{tpu_custom_call.1} parent=1 // pred_check_branch
      %34 = sbr.rel (0) target = $region17
    $region16: #{tpu_custom_call.1} parent=1 // pred_region
      %36 = dma.done [#allocation3], 256
    $region17: #{tpu_custom_call.1} parent=1 // pred_fallthru
      _
    %37 = vsyncpa [#allocation3], 1

</llo_original>
